<compile_context>
chip_gen: v6e
topology: v6e:2x2x1
jax: 0.10.0
libtpu: 0.0.40
codegen_flags: <defaults>
</compile_context>

<pallas_src>
import functools
import math

import jax
import jax.numpy as jnp
from jax.experimental import pallas as pl
from jax.experimental.pallas import tpu as pltpu


def _round_up(v: int, m: int) -> int:
    return ((v + m - 1) // m) * m


def _pad_kernel(x_ref, o_ref, *, h, w, wp, tile_h, fill, mask_rows):
    """Process one (bb, tile_h, *) block: copy valid input, fill pad strips only."""
    fill_v = jnp.asarray(fill, dtype=o_ref.dtype)
    x = x_ref[...]                                    # (bb, tile_h, w)
    if mask_rows:  # static: pad_h > 0
        # Rows >= h of this tile are bottom-pad rows (the corresponding input
        # block rows are out-of-bounds garbage) -> select the fill value.
        # Left un-gated on purpose: the select is free filler under the DMA
        # bottleneck (per review).
        row0 = pl.program_id(1) * tile_h
        rows = row0 + jax.lax.broadcasted_iota(jnp.int32, (1, tile_h, 1), 1)
        x = jnp.where(rows < h, x, fill_v)
    # Main region: single write per element (no full-tile pre-fill).
    o_ref[:, :, :w] = x
    if wp > w:  # static: pad_w > 0 -> fill only the narrow right strip.
        o_ref[:, :, w:] = jnp.full((o_ref.shape[0], tile_h, wp - w), fill_v,
                                   dtype=o_ref.dtype)


def pad_to_divisible(x: jax.Array, divisor: int, fill=0, *,
                     block_budget_bytes: int = 16 * 1024 * 1024,
                     min_grid_steps: int = 8) -> jax.Array:
    """Pad (..., H, W) so H and W are divisible by `divisor`.

    Padding goes on the bottom (H) and right (W), filled with `fill` (cast to
    x.dtype). Returns the input unchanged if no padding is required.
    """
    assert x.ndim >= 2, "expected at least (..., H, W)"
    *lead, h, w = x.shape
    pad_h = (divisor - h % divisor) % divisor
    pad_w = (divisor - w % divisor) % divisor
    if pad_h == 0 and pad_w == 0:
        return x

    hp, wp = h + pad_h, w + pad_w
    b = int(math.prod(lead)) if lead else 1
    xb = x.reshape(b, h, w)

    dtype = jnp.dtype(x.dtype)
    itemsize = dtype.itemsize

    # Validate the fill for integer dtypes (torch-side fills are integral).
    if jnp.issubdtype(dtype, jnp.integer) and isinstance(fill, float):
        if not float(fill).is_integer():
            raise ValueError(f"non-integral fill {fill!r} for integer dtype {dtype}")
        fill = int(fill)

    # Dtype-aware packed-sublane multiple: f32/i32 -> 8, bf16/f16 -> 16, int8 -> 32.
    sub = max(8, 32 // max(itemsize, 1))

    # --- H tile (multiple of the packed sublane count), resolution independent.
    # One in+out block pair <= block_budget_bytes; Pallas double-buffers (~2x).
    bytes_per_row = (w + wp) * itemsize
    rows_fit = max(sub, (block_budget_bytes // max(bytes_per_row, 1)) // sub * sub)
    tile_h = min(_round_up(hp, sub), rows_fit)

    # --- Pack several (n, c) slices per block when a single slice is small, to
    # amortize the ~0.35 us per-grid-step overhead. Partial last B blocks are
    # allowed (no divisibility requirement on b).
    bb = 1
    if pl.cdiv(hp, tile_h) == 1:
        slab = tile_h * bytes_per_row
        bb = max(1, min(b, block_budget_bytes // max(slab, 1)))

    # --- Keep the grid long enough to (a) feed both v7x TensorCores and
    # (b) overlap input/output DMA, whenever there is enough data to split.
    total_bytes = (b * h * w + b * hp * wp) * itemsize
    if total_bytes >= (1 << 20):
        def _steps():
            return pl.cdiv(b, bb) * pl.cdiv(hp, tile_h)
        # Prefer un-packing B slices first (keeps blocks tall & lane-dense) ...
        while _steps() < min_grid_steps and bb > 1:
            bb = (bb + 1) // 2
        # ... then split H, keeping tile_h a multiple of the native sublane count.
        while _steps() < min_grid_steps and tile_h > sub:
            tile_h = max(sub, ((tile_h // 2) // sub) * sub)

    num_b = pl.cdiv(b, bb)
    num_h = pl.cdiv(hp, tile_h)

    # Clamp the input block index so we never request a fully out-of-bounds
    # input tile (possible when a whole output tile lies in the bottom pad).
    last_in_tile = pl.cdiv(h, tile_h) - 1

    # VMEM limit sized to the actual double-buffered in+out footprint (handles
    # very wide images where even one sublane-group of rows exceeds the budget).
    pair_bytes = bb * tile_h * bytes_per_row
    vmem_limit = int(max(32 * 1024 * 1024, 2 * pair_bytes + (4 << 20)))

    kernel = functools.partial(_pad_kernel, h=h, w=w, wp=wp, tile_h=tile_h,
                               fill=fill, mask_rows=pad_h > 0)

    out = pl.pallas_call(
        kernel,
        out_shape=jax.ShapeDtypeStruct((b, hp, wp), x.dtype),
        grid=(num_b, num_h),
        in_specs=[pl.BlockSpec(
            (bb, tile_h, w),
            lambda bi, ti: (bi, jnp.minimum(ti, last_in_tile), 0))],
        out_specs=pl.BlockSpec((bb, tile_h, wp), lambda bi, ti: (bi, ti, 0)),
        compiler_params=pltpu.CompilerParams(
            dimension_semantics=("parallel", "parallel"),
            vmem_limit_bytes=vmem_limit,
        ),
        cost_estimate=pl.CostEstimate(flops=0, transcendentals=0,
                                      bytes_accessed=int(total_bytes)),
    )(xb)
    return out.reshape(*lead, hp, wp)


if __name__ == "__main__":
    key = jax.random.PRNGKey(0)

    def ref_pad(x, divisor, fill):
        h, w = x.shape[-2:]
        ph = (divisor - h % divisor) % divisor
        pw = (divisor - w % divisor) % divisor
        pad = [(0, 0)] * (x.ndim - 2) + [(0, ph), (0, pw)]
        return jnp.pad(x, pad, mode="constant", constant_values=fill)

    # Case 1: both H and W padded; all 8 (n, c) slices packed into one block.
    x1 = jax.random.normal(key, (2, 4, 13, 10), dtype=jnp.float32)
    o1 = jax.block_until_ready(pad_to_divisible(x1, 8, fill=127.0))
    assert o1.shape == (2, 4, 16, 16) and o1.dtype == x1.dtype
    assert jnp.array_equal(o1, ref_pad(x1, 8, 127.0))

    # Case 2: width-only padding (no row-mask path), integer label-style fill.
    x2 = jax.random.randint(key, (2, 4, 16, 13), 0, 255, dtype=jnp.int32)
    o2 = jax.block_until_ready(pad_to_divisible(x2, 8, fill=255))
    assert o2.dtype == jnp.int32
    assert jnp.array_equal(o2, ref_pad(x2, 8, 255))

    # Case 3: tiny block budget to force multiple H tiles, including a tile
    # lying entirely in the bottom pad (exercises the clamped input index map).
    x3 = jax.random.normal(jax.random.PRNGKey(0), (2, 2, 16, 10), dtype=jnp.float32)
    o3 = jax.block_until_ready(
        pad_to_divisible(x3, 24, fill=-1.0, block_budget_bytes=512))
    assert o3.shape == (2, 2, 24, 24)
    assert jnp.array_equal(o3, ref_pad(x3, 24, -1.0))

    # Case 4: odd leading-dim product -> partial last B block (bb need not divide b).
    x4 = jax.random.normal(key, (5, 1, 13, 10), dtype=jnp.float32)
    o4 = jax.block_until_ready(
        pad_to_divisible(x4, 8, fill=0.0, block_budget_bytes=4096))
    assert o4.shape == (5, 1, 16, 16)
    assert jnp.array_equal(o4, ref_pad(x4, 8, 0.0))

    # Case 5: bf16 image (packed dtype -> 16-row native tiles).
    x5 = jax.random.normal(key, (2, 4, 13, 10), dtype=jnp.bfloat16)
    o5 = jax.block_until_ready(pad_to_divisible(x5, 8, fill=127.0))
    assert o5.dtype == jnp.bfloat16 and o5.shape == (2, 4, 16, 16)
    assert jnp.array_equal(o5, ref_pad(x5, 8, 127.0))

    # Case 6: uint8 label map (packed dtype -> 32-row native tiles), IGNORE-style fill.
    x6 = (jax.random.randint(key, (2, 29, 10), 0, 200, dtype=jnp.int32)
          .astype(jnp.uint8))
    o6 = jax.block_until_ready(pad_to_divisible(x6, 32, fill=255))
    assert o6.dtype == jnp.uint8 and o6.shape == (2, 32, 32)
    assert jnp.array_equal(o6, ref_pad(x6, 32, 255))

    # Already divisible -> returned unchanged (matches the torch early return).
    y = jax.random.normal(key, (2, 4, 16, 16), dtype=jnp.float32)
    assert pad_to_divisible(y, 8, fill=127.0) is y

    print("KERNEL_OK")
</pallas_src>

<mosaic_0001>
module attributes {stable_mosaic.version = 11 : i64} {
  func.func @_pad_kernel(%arg0: i32, %arg1: i32, %arg2: memref<8x16x10xf32, #tpu.memory_space<vmem>>, %arg3: memref<8x16x16xf32, #tpu.memory_space<vmem>>) attributes {dimension_semantics = [#tpu.dimension_semantics<parallel>, #tpu.dimension_semantics<parallel>], iteration_bounds = array<i64: 1, 1>, scalar_prefetch = 0 : i64, scratch_operands = 0 : i64, tpu.core_type = #tpu.core_type<tc>, window_params = [{transform_indices = @transform_0, window_bounds = array<i64: 8, 16, 10>}, {transform_indices = @transform_1, window_bounds = array<i64: 8, 16, 16>}]} {
    %c0 = arith.constant 0 : index
    %c0_0 = arith.constant 0 : index
    %c0_1 = arith.constant 0 : index
    %0 = vector.load %arg2[%c0, %c0_0, %c0_1] : memref<8x16x10xf32, #tpu.memory_space<vmem>>, vector<8x16x10xf32>
    %c16_i32 = arith.constant 16 : i32
    %1 = arith.muli %arg1, %c16_i32 : i32
    %2 = tpu.iota {dimensions = array<i32: 1>} : vector<1x16x1xi32>
    %3 = vector.broadcast %1 : i32 to vector<1x16x1xi32>
    %4 = arith.addi %3, %2 : vector<1x16x1xi32>
    %c13_i32 = arith.constant 13 : i32
    %5 = vector.broadcast %c13_i32 : i32 to vector<1x16x1xi32>
    %6 = arith.cmpi slt, %4, %5 : vector<1x16x1xi32>
    %cst = arith.constant 1.270000e+02 : f32
    %7 = vector.shape_cast %6 : vector<1x16x1xi1> to vector<1x16x1xi1>
    %8 = vector.broadcast %7 : vector<1x16x1xi1> to vector<8x16x10xi1>
    %9 = vector.broadcast %cst : f32 to vector<8x16x10xf32>
    %10 = arith.select %8, %0, %9 : vector<8x16x10xi1>, vector<8x16x10xf32>
    %c0_2 = arith.constant 0 : index
    %c0_3 = arith.constant 0 : index
    %c0_4 = arith.constant 0 : index
    %11 = vector.load %arg3[%c0_2, %c0_3, %c0_4] : memref<8x16x16xf32, #tpu.memory_space<vmem>>, vector<8x16x10xf32>
    tpu.vector_store %arg3[%c0_2, %c0_3, %c0_4], %10 {strides = array<i32>} : memref<8x16x16xf32, #tpu.memory_space<vmem>>, vector<8x16x10xf32>,
    %cst_5 = arith.constant 1.270000e+02 : f32
    %12 = vector.broadcast %cst_5 : f32 to vector<8x16x6xf32>
    %c0_6 = arith.constant 0 : index
    %c0_7 = arith.constant 0 : index
    %c10 = arith.constant 10 : index
    %13 = vector.load %arg3[%c0_6, %c0_7, %c10] : memref<8x16x16xf32, #tpu.memory_space<vmem>>, vector<8x16x6xf32>
    tpu.vector_store %arg3[%c0_6, %c0_7, %c10], %12 {strides = array<i32>} : memref<8x16x16xf32, #tpu.memory_space<vmem>>, vector<8x16x6xf32>,
    return
  }
  func.func @transform_0(%arg0: i32, %arg1: i32) -> (i32, i32, i32) {
    %c0_i32 = arith.constant 0 : i32
    %0 = arith.minsi %arg1, %c0_i32 : i32
    %c0_i32_0 = arith.constant 0 : i32
    %c0_i32_1 = arith.constant 0 : i32
    return %arg0, %0, %c0_i32_0 : i32, i32, i32
  }
  func.func @transform_1(%arg0: i32, %arg1: i32) -> (i32, i32, i32) {
    %c0_i32 = arith.constant 0 : i32
    %c0_i32_0 = arith.constant 0 : i32
    return %arg0, %arg1, %c0_i32 : i32, i32, i32
  }
}

</mosaic_0001>

<llo_original>
// kernel: tpu_custom_call.1
$region0: #{tpu_custom_call.1}
  #allocation0 [shape = 'u32[]', space=smem, size = 0x4, offset = 0x4, fixed_abs, tag = 'smem constant byte address 0x4 - core index']
  #allocation1 [shape = 'u32[144,128]{1,0:T(1,128)}', space=vmem, size = 0x12000, scoped, tag = 'internal scratch']
  %s0 = inlined_call_operand.vmem [shape: f32[8,13,10], index: 0, kind: input, shape index: {}]
  %s1 = inlined_call_operand.hbm [shape: f32[8,16,16], index: 1, kind: output, shape index: {}]
  %s2 = sld [smem:[#allocation0]]
  $region14: #{tpu_custom_call.1} parent=0
    _
  %s4 = ssub.s32 1, %s2
  %s5 = scalar_select 0, %s4, %s2
  $region1: #{tpu_custom_call.1} parent=0
    #allocation2 [shape = 'u8[65536]{0}', space=vmem, size = 0x10000, scoped, tag = 'output window, operand 0, single buffered']
    #allocation3 [shape = 's32[1]{0}', space=sflag, size = 0x4, scoped, tag = 'scoped memory for tpu_custom_call.1']
    %6 = vsyncpa [#allocation3], 0
    // Predicated region
    $region2: #{tpu_custom_call.1} parent=1 // pred_check
      _
    $region3: #{tpu_custom_call.1} parent=1 // pred_check_branch
      %8 = sbr.rel (0) target = $region5
    $region4: #{tpu_custom_call.1} parent=1 // pred_region
      _
    $region5: #{tpu_custom_call.1} parent=1 // pred_fallthru
      _
    %v9 = vld [vmem:[%s0] sm:$0xff]
    %v10 = vld [vmem:[%s0 + $0x8] sm:$0xff]
    %v11 = vld [vmem:[%s0 + $0x10] sm:$0xff]
    %v12 = vld [vmem:[%s0 + $0x18] sm:$0xff]
    %v13 = vld [vmem:[%s0 + $0x20] sm:$0xff]
    %v14 = vld [vmem:[%s0 + $0x28] sm:$0xff]
    %v15 = vld [vmem:[%s0 + $0x30] sm:$0xff]
    %v16 = vld [vmem:[%s0 + $0x38] sm:$0xff]
    %v17 = vld [vmem:[%s0 + $0x40] sm:$0xff]
    %v18 = vld [vmem:[%s0 + $0x48] sm:$0xff]
    %v19 = vld [vmem:[%s0 + $0x50] sm:$0xff]
    %v20 = vld [vmem:[%s0 + $0x58] sm:$0xff]
    %v21 = vld [vmem:[%s0 + $0x60] sm:$0xff]
    %v22 = vld [vmem:[%s0 + $0x68] sm:$0xff]
    %v23 = vld [vmem:[%s0 + $0x70] sm:$0xff]
    %v24 = vld [vmem:[%s0 + $0x78] sm:$0xff]
    %s25 = smul.u32 0, 16
    %v26 = vlaneseq
    %v27 = vshrl.u32 %v26, 7
    %v28 = vadd.s32 %v27, 8
    %v29 = vstv %s25
    %v30 = vadd.s32 %v29, %v27
    %v31 = vadd.s32 %v29, %v28
    %vm32 = vcmp.lt.s32.totalorder %v30, 13
    %vm33 = vcmp.lt.s32.totalorder %v31, 13
    %v34 = vsel %vm32, 1, 0
    %v35 = vsel %vm33, 1, 0
    %vm36 = vcmp.eq.s32.totalorder %v34, 1
    %vm37 = vcmp.eq.s32.totalorder %v35, 1
    %v38 = vsel %vm36, %v9, 127.0
    %v39 = vsel %vm37, %v10, 127.0
    %v40 = vsel %vm36, %v11, 127.0
    %v41 = vsel %vm37, %v12, 127.0
    %v42 = vsel %vm36, %v13, 127.0
    %v43 = vsel %vm37, %v14, 127.0
    %v44 = vsel %vm36, %v15, 127.0
    %v45 = vsel %vm37, %v16, 127.0
    %v46 = vsel %vm36, %v17, 127.0
    %v47 = vsel %vm37, %v18, 127.0
    %v48 = vsel %vm36, %v19, 127.0
    %v49 = vsel %vm37, %v20, 127.0
    %v50 = vsel %vm36, %v21, 127.0
    %v51 = vsel %vm37, %v22, 127.0
    %v52 = vsel %vm36, %v23, 127.0
    %v53 = vsel %vm37, %v24, 127.0
    %vm54 = vcmask 80896
    %55 = vst.msk [vmem:[#allocation2] sm:$0xff] %vm54, %v38
    %56 = vst.msk [vmem:[#allocation2 + $0x8] sm:$0xff] %vm54, %v39
    %57 = vst.msk [vmem:[#allocation2 + $0x10] sm:$0xff] %vm54, %v40
    %58 = vst.msk [vmem:[#allocation2 + $0x18] sm:$0xff] %vm54, %v41
    %59 = vst.msk [vmem:[#allocation2 + $0x20] sm:$0xff] %vm54, %v42
    %60 = vst.msk [vmem:[#allocation2 + $0x28] sm:$0xff] %vm54, %v43
    %61 = vst.msk [vmem:[#allocation2 + $0x30] sm:$0xff] %vm54, %v44
    %62 = vst.msk [vmem:[#allocation2 + $0x38] sm:$0xff] %vm54, %v45
    %63 = vst.msk [vmem:[#allocation2 + $0x40] sm:$0xff] %vm54, %v46
    %64 = vst.msk [vmem:[#allocation2 + $0x48] sm:$0xff] %vm54, %v47
    %65 = vst.msk [vmem:[#allocation2 + $0x50] sm:$0xff] %vm54, %v48
    %66 = vst.msk [vmem:[#allocation2 + $0x58] sm:$0xff] %vm54, %v49
    %67 = vst.msk [vmem:[#allocation2 + $0x60] sm:$0xff] %vm54, %v50
    %68 = vst.msk [vmem:[#allocation2 + $0x68] sm:$0xff] %vm54, %v51
    %69 = vst.msk [vmem:[#allocation2 + $0x70] sm:$0xff] %vm54, %v52
    %70 = vst.msk [vmem:[#allocation2 + $0x78] sm:$0xff] %vm54, %v53
    %vm71 = vcmask 130128
    %72 = vst.msk [vmem:[#allocation2] sm:$0xff] %vm71, 127.0
    %73 = vst.msk [vmem:[#allocation2 + $0x8] sm:$0xff] %vm71, 127.0
    %74 = vst.msk [vmem:[#allocation2 + $0x10] sm:$0xff] %vm71, 127.0
    %75 = vst.msk [vmem:[#allocation2 + $0x18] sm:$0xff] %vm71, 127.0
    %76 = vst.msk [vmem:[#allocation2 + $0x20] sm:$0xff] %vm71, 127.0
    %77 = vst.msk [vmem:[#allocation2 + $0x28] sm:$0xff] %vm71, 127.0
    %78 = vst.msk [vmem:[#allocation2 + $0x30] sm:$0xff] %vm71, 127.0
    %79 = vst.msk [vmem:[#allocation2 + $0x38] sm:$0xff] %vm71, 127.0
    %80 = vst.msk [vmem:[#allocation2 + $0x40] sm:$0xff] %vm71, 127.0
    %81 = vst.msk [vmem:[#allocation2 + $0x48] sm:$0xff] %vm71, 127.0
    %82 = vst.msk [vmem:[#allocation2 + $0x50] sm:$0xff] %vm71, 127.0
    %83 = vst.msk [vmem:[#allocation2 + $0x58] sm:$0xff] %vm71, 127.0
    %84 = vst.msk [vmem:[#allocation2 + $0x60] sm:$0xff] %vm71, 127.0
    %85 = vst.msk [vmem:[#allocation2 + $0x68] sm:$0xff] %vm71, 127.0
    %86 = vst.msk [vmem:[#allocation2 + $0x70] sm:$0xff] %vm71, 127.0
    %87 = vst.msk [vmem:[#allocation2 + $0x78] sm:$0xff] %vm71, 127.0
    // Predicated region
    $region6: #{tpu_custom_call.1} parent=1 // pred_check
      _
    $region7: #{tpu_custom_call.1} parent=1 // pred_check_branch
      %89 = sbr.rel (0) target = $region9
    $region8: #{tpu_custom_call.1} parent=1 // pred_region
      %s91 = ssub.s32 2048, 2048
      %92 = vsyncadd [#allocation3], %s91
      %s93 = sshll.u32 [#allocation2], 4
      %s94 = int_to_ptr.vmem [resolvable:$true] %s93
      %99 = dma.vmem_to_hbm [thread:$0]  %s94, 2048, %s1, [#allocation3], 128, 128, 8
    $region9: #{tpu_custom_call.1} parent=1 // pred_fallthru
      _
    // Predicated region
    $region10: #{tpu_custom_call.1} parent=1 // pred_check
      _
    $region11: #{tpu_custom_call.1} parent=1 // pred_check_branch
      %101 = sbr.rel (0) target = $region13
    $region12: #{tpu_custom_call.1} parent=1 // pred_region
      %102 = dma.done [#allocation3], 2048
    $region13: #{tpu_custom_call.1} parent=1 // pred_fallthru
      _
    %103 = vsyncpa [#allocation3], 1

</llo_original>
